<compile_context>
chip_gen: v7x
topology: tpu7x:2x2x1
jax: 0.10.0
libtpu: 0.0.40
codegen_flags: <defaults>
</compile_context>

<pallas_src>
import jax
import jax.numpy as jnp
import numpy as np
from jax.experimental import pallas as pl
from jax.experimental.pallas import tpu as pltpu


def _round_up(x, m):
    return ((x + m - 1) // m) * m


# ---------------------------------------------------------------------------
# Kernel: y = sum_x dot(x, M_x) + bias ; write 4 native-width outputs.
# ---------------------------------------------------------------------------
def _make_lam_kernel(n_streams):
    def kernel(*refs):
        x_refs = refs[:n_streams]
        w_refs = refs[n_streams:2 * n_streams]
        b_ref = refs[2 * n_streams]
        obs_ref, act_ref, obsv_ref, noi_ref = refs[2 * n_streams + 1:]

        # Independent MXU dots (no serial chain, no lane concat); f32 accum.
        acc = None
        for x_ref, w_ref in zip(x_refs, w_refs):
            part = jnp.dot(x_ref[...].astype(w_ref.dtype), w_ref[...],
                           preferred_element_type=jnp.float32)
            acc = part if acc is None else acc + part
        y = acc + b_ref[...]                       # (TM, total), f32

        d_o = obs_ref.shape[-1]
        d_a = act_ref.shape[-1]
        obs_ref[...] = y[:, :d_o].astype(obs_ref.dtype)
        act_ref[...] = y[:, d_o:d_o + d_a].astype(act_ref.dtype)
        obsv_ref[...] = y[:, d_o + d_a:2 * d_o + d_a].astype(obsv_ref.dtype)
        noi_ref[...] = y[:, 2 * d_o + d_a:].astype(noi_ref.dtype)

    return kernel


# ---------------------------------------------------------------------------
# One-time weight preparation (all fusion math in f32; cast once at the end).
# ---------------------------------------------------------------------------
def prepare_params(params, pseudo_latent=True, compute_dtype=jnp.bfloat16):
    """Fuse the 7 PyTorch linears into one (d_o, total) weight per input stream.

    params use PyTorch layouts: weights (out, in), biases (out,).
    """
    d_o = params["A"].shape[0]
    d_a = params["action_w"].shape[0]
    d_b = params["noise_w"].shape[0]
    f32 = jnp.float32

    wa = params["A"].T.astype(f32)     # (d_o, d_o)
    wb = params["B"].T.astype(f32)     # (d_z, d_o)
    wc = params["C"].T.astype(f32)     # (d_o, d_z)
    wd = params["D"].T.astype(f32)     # (d_o, d_z)
    w_h = jnp.concatenate([params["action_w"].T, params["obs_w"].T,
                           params["noise_w"].T], axis=1).astype(f32)
    b_h = jnp.concatenate([params["action_b"], params["obs_b"],
                           params["noise_b"]], axis=0).astype(f32)

    eye = jnp.eye(d_o, dtype=f32)
    # obs_pred columns per stream.
    p_o = wa + wc @ wb
    p_on = wd @ wb
    p_k1 = (wc + wd) @ wb
    p_k2 = wa - eye

    # head columns per stream.
    if pseudo_latent:
        h_o = (p_o - eye) @ w_h
        h_on = p_on @ w_h
        h_k1 = p_k1 @ w_h
        h_k2 = p_k2 @ w_h
    else:  # heads read z instead of (obs_pred - o); k2 never reaches the heads.
        h_o = wc @ w_h
        h_on = wd @ w_h
        h_k1 = (wc + wd) @ w_h
        h_k2 = jnp.zeros((d_o, w_h.shape[1]), f32)

    def fuse(p, h):
        return jnp.concatenate([p, h], axis=1).astype(compute_dtype)

    total = 2 * d_o + d_a + d_b
    bias = jnp.concatenate([jnp.zeros((d_o,), f32), b_h]).reshape(1, total)

    return {
        "m_o": fuse(p_o, h_o),
        "m_on": fuse(p_on, h_on),
        "m_k1": fuse(p_k1, h_k1),
        "m_k2": fuse(p_k2, h_k2),
        "bias": bias,
        "dims": (d_o, d_a, d_b),
        "compute_dtype": compute_dtype,
    }


# ---------------------------------------------------------------------------
# Forward wrapper
# ---------------------------------------------------------------------------
def lam_linear_forward(o, o_next, prepared, kappa1=None, kappa2=None):
    d_o, d_a, d_b = prepared["dims"]
    total = 2 * d_o + d_a + d_b
    B = o.shape[0]

    # Independent specialization on each kappa: no zeros array, no extra DMA.
    streams = [o, o_next]
    weights = [prepared["m_o"], prepared["m_on"]]
    if kappa1 is not None:
        streams.append(kappa1)
        weights.append(prepared["m_k1"])
    if kappa2 is not None:
        streams.append(kappa2)
        weights.append(prepared["m_k2"])
    n_streams = len(streams)

    # Large batch tiles to amortize per-step overhead; >=2 grid steps once B is
    # big enough so "parallel" can shard across both v7x TensorCores.
    TM_CAP = 2048
    if B <= 1024:
        tm = B
    elif B <= 2 * TM_CAP:
        tm = _round_up((B + 1) // 2, 8)
    else:
        tm = TM_CAP
    grid = (pl.cdiv(B, tm),)

    act_spec = pl.BlockSpec((tm, d_o), lambda i: (i, 0))
    in_specs = [act_spec] * n_streams
    # Weights/bias: constant index_map -> DMA'd once, VMEM-resident.
    in_specs += [pl.BlockSpec(w.shape, lambda i: (0, 0)) for w in weights]
    in_specs += [pl.BlockSpec(prepared["bias"].shape, lambda i: (0, 0))]

    out_dims = (d_o, d_a, d_o, d_b)
    out_shape = tuple(jax.ShapeDtypeStruct((B, d), o.dtype) for d in out_dims)
    out_specs = tuple(pl.BlockSpec((tm, d), lambda i: (i, 0)) for d in out_dims)

    # Scheduler hints.
    itemsize_in = jnp.dtype(o.dtype).itemsize
    itemsize_w = jnp.dtype(prepared["compute_dtype"]).itemsize
    flops = 2 * B * d_o * total * n_streams
    in_bytes = (n_streams * B * d_o * itemsize_in
                + sum(int(w.size) for w in weights) * itemsize_w
                + int(prepared["bias"].size) * 4)
    cost = pl.CostEstimate(flops=int(flops), transcendentals=0,
                           bytes_accessed=int(in_bytes + B * total * itemsize_in))

    # VMEM budget: double-buffered activation/output tiles + resident weights,
    # generous headroom, capped below v7x's 64 MiB physical VMEM.
    weight_bytes = sum(int(w.size) for w in weights) * itemsize_w \
        + int(prepared["bias"].size) * 4
    act_bytes = n_streams * tm * d_o * itemsize_in
    out_bytes = tm * total * itemsize_in
    vmem_limit = int(min(max(4 * (weight_bytes + act_bytes + out_bytes) + (2 << 20),
                             16 << 20), 56 << 20))

    obs_pred, action, observation, noise = pl.pallas_call(
        _make_lam_kernel(n_streams),
        out_shape=out_shape,
        grid=grid,
        in_specs=in_specs,
        out_specs=out_specs,
        compiler_params=pltpu.CompilerParams(
            dimension_semantics=("parallel",),
            vmem_limit_bytes=vmem_limit),
        cost_estimate=cost,
    )(*streams, *weights, prepared["bias"])

    return obs_pred, (action, observation, noise)


# ---------------------------------------------------------------------------
# Param init (mimics PyTorch nn.Linear default init) + pure-JAX reference
# ---------------------------------------------------------------------------
def init_params(key, d_o, d_z, d_a, d_b, pseudo_latent=True):
    ks = jax.random.split(key, 10)
    head_in = d_o if pseudo_latent else d_z

    def lin_w(k, out_f, in_f):
        bound = 1.0 / np.sqrt(in_f)
        return jax.random.uniform(k, (out_f, in_f), jnp.float32, -bound, bound)

    def lin_b(k, out_f, in_f):
        bound = 1.0 / np.sqrt(in_f)
        return jax.random.uniform(k, (out_f,), jnp.float32, -bound, bound)

    return {
        "A": lin_w(ks[0], d_o, d_o),
        "C": lin_w(ks[1], d_z, d_o),
        "D": lin_w(ks[2], d_z, d_o),
        "B": lin_w(ks[3], d_o, d_z),
        "action_w": lin_w(ks[4], d_a, head_in),
        "action_b": lin_b(ks[5], d_a, head_in),
        "obs_w": lin_w(ks[6], d_o, head_in),
        "obs_b": lin_b(ks[7], d_o, head_in),
        "noise_w": lin_w(ks[8], d_b, head_in),
        "noise_b": lin_b(ks[9], d_b, head_in),
    }


def reference_forward(o, o_next, params, kappa1=None, kappa2=None,
                      pseudo_latent=True):
    if kappa1 is None:
        kappa1 = jnp.zeros_like(o)
    if kappa2 is None:
        kappa2 = jnp.zeros_like(o)
    lin = lambda x, w: x @ w.T
    z = lin(o + kappa1, params["C"]) + lin(o_next + kappa1, params["D"])
    obs_pred = lin(o + kappa2, params["A"]) + lin(z, params["B"]) - kappa2
    feat = (obs_pred - o) if pseudo_latent else z
    action = lin(feat, params["action_w"]) + params["action_b"]
    observation = lin(feat, params["obs_w"]) + params["obs_b"]
    noise = lin(feat, params["noise_w"]) + params["noise_b"]
    return obs_pred, (action, observation, noise)


if __name__ == "__main__":
    batch, d_o, d_z, d_a, d_b = 8, 32, 16, 8, 4

    key = jax.random.PRNGKey(0)
    k_o, k_on, k_p, k_k1, k_k2 = jax.random.split(key, 5)
    o = jax.random.normal(k_o, (batch, d_o), jnp.float32)
    o_next = jax.random.normal(k_on, (batch, d_o), jnp.float32)
    kappa1 = jax.random.normal(k_k1, (batch, d_o), jnp.float32)
    kappa2 = jax.random.normal(k_k2, (batch, d_o), jnp.float32)
    params = init_params(k_p, d_o, d_z, d_a, d_b)

    def check(got, want, atol, rtol):
        for g, w in zip(jax.tree_util.tree_leaves(got),
                        jax.tree_util.tree_leaves(want)):
            np.testing.assert_allclose(np.asarray(g), np.asarray(w),
                                       atol=atol, rtol=rtol)

    # --- f32 path, no kappas (2-stream specialization) ----------------------
    prep_f32 = prepare_params(params, compute_dtype=jnp.float32)
    out = lam_linear_forward(o, o_next, prep_f32)
    jax.block_until_ready(out)
    check(out, reference_forward(o, o_next, params), 1e-4, 1e-4)

    # --- f32 path, both kappas (4-stream kernel) -----------------------------
    out = lam_linear_forward(o, o_next, prep_f32, kappa1=kappa1, kappa2=kappa2)
    jax.block_until_ready(out)
    check(out, reference_forward(o, o_next, params, kappa1, kappa2), 1e-4, 1e-4)

    # --- f32 path, kappa1 only (independent kappa specialization) ------------
    out = lam_linear_forward(o, o_next, prep_f32, kappa1=kappa1)
    jax.block_until_ready(out)
    check(out, reference_forward(o, o_next, params, kappa1, None), 1e-4, 1e-4)

    # --- bf16 operands (default), f32 accumulation: check ALL outputs --------
    prep_bf16 = prepare_params(params)  # compute_dtype=jnp.bfloat16 default
    out = lam_linear_forward(o, o_next, prep_bf16, kappa1=kappa1, kappa2=kappa2)
    jax.block_until_ready(out)
    check(out, reference_forward(o, o_next, params, kappa1, kappa2), 7e-2, 7e-2)

    # --- pseudo_latent=False path (heads read z) ------------------------------
    params_nl = init_params(k_p, d_o, d_z, d_a, d_b, pseudo_latent=False)
    prep_nl = prepare_params(params_nl, pseudo_latent=False,
                             compute_dtype=jnp.float32)
    out = lam_linear_forward(o, o_next, prep_nl, kappa1=kappa1, kappa2=kappa2)
    jax.block_until_ready(out)
    check(out, reference_forward(o, o_next, params_nl, kappa1, kappa2,
                                 pseudo_latent=False), 1e-4, 1e-4)

    print("KERNEL_OK")
</pallas_src>

<mosaic_0001>
module attributes {stable_mosaic.version = 11 : i64} {
  func.func @kernel(%arg0: i32, %arg1: memref<8x32xf32, #tpu.memory_space<vmem>>, %arg2: memref<8x32xf32, #tpu.memory_space<vmem>>, %arg3: memref<32x76xf32, #tpu.memory_space<vmem>>, %arg4: memref<32x76xf32, #tpu.memory_space<vmem>>, %arg5: memref<1x76xf32, #tpu.memory_space<vmem>>, %arg6: memref<8x32xf32, #tpu.memory_space<vmem>>, %arg7: memref<8x8xf32, #tpu.memory_space<vmem>>, %arg8: memref<8x32xf32, #tpu.memory_space<vmem>>, %arg9: memref<8x4xf32, #tpu.memory_space<vmem>>) attributes {dimension_semantics = [#tpu.dimension_semantics<parallel>], iteration_bounds = array<i64: 1>, scalar_prefetch = 0 : i64, scratch_operands = 0 : i64, tpu.core_type = #tpu.core_type<tc>, window_params = [{transform_indices = @transform_0, window_bounds = array<i64: 8, 32>}, {transform_indices = @transform_1, window_bounds = array<i64: 8, 32>}, {pipeline_mode = #tpu.pipeline_mode<synchronous>, transform_indices = @transform_2, window_bounds = array<i64: 32, 76>}, {pipeline_mode = #tpu.pipeline_mode<synchronous>, transform_indices = @transform_3, window_bounds = array<i64: 32, 76>}, {pipeline_mode = #tpu.pipeline_mode<synchronous>, transform_indices = @transform_4, window_bounds = array<i64: 1, 76>}, {transform_indices = @transform_5, window_bounds = array<i64: 8, 32>}, {transform_indices = @transform_6, window_bounds = array<i64: 8, 8>}, {transform_indices = @transform_7, window_bounds = array<i64: 8, 32>}, {transform_indices = @transform_8, window_bounds = array<i64: 8, 4>}]} {
    %c0 = arith.constant 0 : index
    %c0_0 = arith.constant 0 : index
    %0 = vector.load %arg1[%c0, %c0_0] : memref<8x32xf32, #tpu.memory_space<vmem>>, vector<8x32xf32>
    %c0_1 = arith.constant 0 : index
    %c0_2 = arith.constant 0 : index
    %1 = vector.load %arg3[%c0_1, %c0_2] : memref<32x76xf32, #tpu.memory_space<vmem>>, vector<32x76xf32>
    %cst = arith.constant dense<0.000000e+00> : vector<8x76xf32>
    %2 = tpu.matmul %0, %1, %cst {dimension_numbers = #tpu.dot_dimension_numbers<[1], [0], [0], [1], [0, 0, 1, 1], [], []>} : vector<8x32xf32>, vector<32x76xf32>, vector<8x76xf32> -> vector<8x76xf32>
    %c0_3 = arith.constant 0 : index
    %c0_4 = arith.constant 0 : index
    %3 = vector.load %arg2[%c0_3, %c0_4] : memref<8x32xf32, #tpu.memory_space<vmem>>, vector<8x32xf32>
    %c0_5 = arith.constant 0 : index
    %c0_6 = arith.constant 0 : index
    %4 = vector.load %arg4[%c0_5, %c0_6] : memref<32x76xf32, #tpu.memory_space<vmem>>, vector<32x76xf32>
    %cst_7 = arith.constant dense<0.000000e+00> : vector<8x76xf32>
    %5 = tpu.matmul %3, %4, %cst_7 {dimension_numbers = #tpu.dot_dimension_numbers<[1], [0], [0], [1], [0, 0, 1, 1], [], []>} : vector<8x32xf32>, vector<32x76xf32>, vector<8x76xf32> -> vector<8x76xf32>
    %6 = arith.addf %2, %5 : vector<8x76xf32>
    %c0_8 = arith.constant 0 : index
    %c0_9 = arith.constant 0 : index
    %7 = vector.load %arg5[%c0_8, %c0_9] : memref<1x76xf32, #tpu.memory_space<vmem>>, vector<1x76xf32>
    %8 = vector.broadcast %7 : vector<1x76xf32> to vector<8x76xf32>
    %9 = arith.addf %6, %8 : vector<8x76xf32>
    %10 = vector.extract_strided_slice %9 {offsets = [0, 0], sizes = [8, 32], strides = [1, 1]} : vector<8x76xf32> to vector<8x32xf32>
    %c0_10 = arith.constant 0 : index
    %c0_11 = arith.constant 0 : index
    %11 = vector.load %arg6[%c0_10, %c0_11] : memref<8x32xf32, #tpu.memory_space<vmem>>, vector<8x32xf32>
    tpu.vector_store %arg6[%c0_10, %c0_11], %10 {strides = array<i32>} : memref<8x32xf32, #tpu.memory_space<vmem>>, vector<8x32xf32>,
    %12 = vector.extract_strided_slice %9 {offsets = [0, 32], sizes = [8, 8], strides = [1, 1]} : vector<8x76xf32> to vector<8x8xf32>
    %c0_12 = arith.constant 0 : index
    %c0_13 = arith.constant 0 : index
    %13 = vector.load %arg7[%c0_12, %c0_13] : memref<8x8xf32, #tpu.memory_space<vmem>>, vector<8x8xf32>
    tpu.vector_store %arg7[%c0_12, %c0_13], %12 {strides = array<i32>} : memref<8x8xf32, #tpu.memory_space<vmem>>, vector<8x8xf32>,
    %14 = vector.extract_strided_slice %9 {offsets = [0, 40], sizes = [8, 32], strides = [1, 1]} : vector<8x76xf32> to vector<8x32xf32>
    %c0_14 = arith.constant 0 : index
    %c0_15 = arith.constant 0 : index
    %15 = vector.load %arg8[%c0_14, %c0_15] : memref<8x32xf32, #tpu.memory_space<vmem>>, vector<8x32xf32>
    tpu.vector_store %arg8[%c0_14, %c0_15], %14 {strides = array<i32>} : memref<8x32xf32, #tpu.memory_space<vmem>>, vector<8x32xf32>,
    %16 = vector.extract_strided_slice %9 {offsets = [0, 72], sizes = [8, 4], strides = [1, 1]} : vector<8x76xf32> to vector<8x4xf32>
    %c0_16 = arith.constant 0 : index
    %c0_17 = arith.constant 0 : index
    %17 = vector.load %arg9[%c0_16, %c0_17] : memref<8x4xf32, #tpu.memory_space<vmem>>, vector<8x4xf32>
    tpu.vector_store %arg9[%c0_16, %c0_17], %16 {strides = array<i32>} : memref<8x4xf32, #tpu.memory_space<vmem>>, vector<8x4xf32>,
    return
  }
  func.func @transform_0(%arg0: i32) -> (i32, i32) {
    %c0_i32 = arith.constant 0 : i32
    %c0_i32_0 = arith.constant 0 : i32
    return %arg0, %c0_i32 : i32, i32
  }
  func.func @transform_1(%arg0: i32) -> (i32, i32) {
    %c0_i32 = arith.constant 0 : i32
    %c0_i32_0 = arith.constant 0 : i32
    return %arg0, %c0_i32 : i32, i32
  }
  func.func @transform_2(%arg0: i32) -> (i32, i32) {
    %c0_i32 = arith.constant 0 : i32
    %c0_i32_0 = arith.constant 0 : i32
    %c0_i32_1 = arith.constant 0 : i32
    return %c0_i32, %c0_i32_0 : i32, i32
  }
  func.func @transform_3(%arg0: i32) -> (i32, i32) {
    %c0_i32 = arith.constant 0 : i32
    %c0_i32_0 = arith.constant 0 : i32
    %c0_i32_1 = arith.constant 0 : i32
    return %c0_i32, %c0_i32_0 : i32, i32
  }
  func.func @transform_4(%arg0: i32) -> (i32, i32) {
    %c0_i32 = arith.constant 0 : i32
    %c0_i32_0 = arith.constant 0 : i32
    %c0_i32_1 = arith.constant 0 : i32
    return %c0_i32, %c0_i32_0 : i32, i32
  }
  func.func @transform_5(%arg0: i32) -> (i32, i32) {
    %c0_i32 = arith.constant 0 : i32
    %c0_i32_0 = arith.constant 0 : i32
    return %arg0, %c0_i32 : i32, i32
  }
  func.func @transform_6(%arg0: i32) -> (i32, i32) {
    %c0_i32 = arith.constant 0 : i32
    %c0_i32_0 = arith.constant 0 : i32
    return %arg0, %c0_i32 : i32, i32
  }
  func.func @transform_7(%arg0: i32) -> (i32, i32) {
    %c0_i32 = arith.constant 0 : i32
    %c0_i32_0 = arith.constant 0 : i32
    return %arg0, %c0_i32 : i32, i32
  }
  func.func @transform_8(%arg0: i32) -> (i32, i32) {
    %c0_i32 = arith.constant 0 : i32
    %c0_i32_0 = arith.constant 0 : i32
    return %arg0, %c0_i32 : i32, i32
  }
}

</mosaic_0001>

<llo_original>
// kernel: tpu_custom_call.1
$region0: #{tpu_custom_call.1}
  #allocation0 [shape = 'u32[]', space=smem, size = 0x4, offset = 0x4, fixed_abs, tag = 'smem constant byte address 0x4 - core index']
  #allocation1 [shape = 'u32[144,128]{1,0:T(1,128)}', space=vmem, size = 0x12000, scoped, tag = 'internal scratch']
  %s0 = inlined_call_operand.hbm [shape: f32[8,32], index: 0, kind: input, shape index: {}]
  %s1 = inlined_call_operand.hbm [shape: f32[8,32], index: 1, kind: input, shape index: {}]
  %s2 = inlined_call_operand.hbm [shape: f32[32,76], index: 2, kind: input, shape index: {}]
  %s3 = inlined_call_operand.hbm [shape: f32[32,76], index: 3, kind: input, shape index: {}]
  %s4 = inlined_call_operand.vmem [shape: f32[1,76], index: 4, kind: input, shape index: {}]
  %s5 = inlined_call_operand.hbm [shape: f32[8,32], index: 5, kind: output, shape index: {0}]
  %s6 = inlined_call_operand.hbm [shape: f32[8,8], index: 6, kind: output, shape index: {1}]
  %s7 = inlined_call_operand.hbm [shape: f32[8,32], index: 7, kind: output, shape index: {2}]
  %s8 = inlined_call_operand.vmem [shape: f32[8,4], index: 8, kind: output, shape index: {3}]
  %9 = xla_tuple %s5, %s6, %s7, %s8
  %s10 = sld [smem:[#allocation0]]
  $region70: #{tpu_custom_call.1} parent=0
    _
  %s12 = ssub.s32 1, %s10
  %s13 = scalar_select 0, %s12, %s10
  $region1: #{tpu_custom_call.1} parent=0
    #allocation2 [shape = 'u8[4096]{0}', space=vmem, size = 0x1000, scoped, tag = 'input window, operand 0, single buffered']
    #allocation3 [shape = 's32[1]{0}', space=sflag, size = 0x4, scoped, tag = 'scoped memory for tpu_custom_call.1']
    #allocation4 [shape = 's32[1]{0}', space=sflag, size = 0x4, scoped, tag = 'scoped memory for tpu_custom_call.1']
    #allocation5 [shape = 'u8[4096]{0}', space=vmem, size = 0x1000, scoped, tag = 'input window, operand 1, single buffered']
    #allocation6 [shape = 's32[1]{0}', space=sflag, size = 0x4, scoped, tag = 'scoped memory for tpu_custom_call.1']
    #allocation7 [shape = 'u8[16384]{0}', space=vmem, size = 0x4000, scoped, tag = 'input window, operand 2, single buffered']
    #allocation8 [shape = 'u8[16384]{0}', space=vmem, size = 0x4000, scoped, tag = 'input window, operand 3, single buffered']
    #allocation9 [shape = 's32[1]{0}', space=sflag, size = 0x4, scoped, tag = 'scoped memory for tpu_custom_call.1']
    #allocation10 [shape = 'u8[4096]{0}', space=vmem, size = 0x1000, scoped, tag = 'output window, operand 0, single buffered']
    #allocation11 [shape = 'u8[4096]{0}', space=vmem, size = 0x1000, scoped, tag = 'output window, operand 1, single buffered']
    #allocation12 [shape = 's32[1]{0}', space=sflag, size = 0x4, scoped, tag = 'scoped memory for tpu_custom_call.1']
    #allocation13 [shape = 'u8[4096]{0}', space=vmem, size = 0x1000, scoped, tag = 'output window, operand 2, single buffered']
    %14 = vsyncpa [#allocation3], 0
    %15 = vsyncpa [#allocation6], 0
    %16 = vsyncpa [#allocation9], 0
    %17 = vsyncpa [#allocation4], 0
    %18 = vsyncpa [#allocation12], 0
    // Predicated region
    $region2: #{tpu_custom_call.1} parent=1 // pred_check
      _
    $region3: #{tpu_custom_call.1} parent=1 // pred_check_branch
      %20 = sbr.rel (0) target = $region5
    $region4: #{tpu_custom_call.1} parent=1 // pred_region
      %s22 = ssub.s32 128, 128
      %23 = vsyncadd [#allocation3], %s22
      %s25 = sshll.u32 [#allocation2], 4
      %s26 = int_to_ptr.vmem [resolvable:$true] %s25
      %28 = dma.hbm_to_vmem [thread:$0]  %s0, 128, %s26, [#allocation3]
    $region5: #{tpu_custom_call.1} parent=1 // pred_fallthru
      _
    // Predicated region
    $region6: #{tpu_custom_call.1} parent=1 // pred_check
      _
    $region7: #{tpu_custom_call.1} parent=1 // pred_check_branch
      %30 = sbr.rel (0) target = $region9
    $region8: #{tpu_custom_call.1} parent=1 // pred_region
      %s32 = ssub.s32 128, 128
      %33 = vsyncadd [#allocation6], %s32
      %s35 = sshll.u32 [#allocation5], 4
      %s36 = int_to_ptr.vmem [resolvable:$true] %s35
      %38 = dma.hbm_to_vmem [thread:$0]  %s1, 128, %s36, [#allocation6]
    $region9: #{tpu_custom_call.1} parent=1 // pred_fallthru
      _
    // Predicated region
    $region10: #{tpu_custom_call.1} parent=1 // pred_check
      _
    $region11: #{tpu_custom_call.1} parent=1 // pred_check_branch
      %40 = sbr.rel (0) target = $region13
    $region12: #{tpu_custom_call.1} parent=1 // pred_region
      %s42 = ssub.s32 512, 512
      %43 = vsyncadd [#allocation6], %s42
      %s44 = sshll.u32 [#allocation7], 4
      %s45 = int_to_ptr.vmem [resolvable:$true] %s44
      %50 = dma.hbm_to_vmem [thread:$0]  %s2, 512, %s45, [#allocation6], 128, 128, 8
    $region13: #{tpu_custom_call.1} parent=1 // pred_fallthru
      _
    // Predicated region
    $region14: #{tpu_custom_call.1} parent=1 // pred_check
      _
    $region15: #{tpu_custom_call.1} parent=1 // pred_check_branch
      %52 = sbr.rel (0) target = $region17
    $region16: #{tpu_custom_call.1} parent=1 // pred_region
      %s54 = ssub.s32 512, 512
      %55 = vsyncadd [#allocation9], %s54
      %s56 = sshll.u32 [#allocation8], 4
      %s57 = int_to_ptr.vmem [resolvable:$true] %s56
      %62 = dma.hbm_to_vmem [thread:$0]  %s3, 512, %s57, [#allocation9], 128, 128, 8
    $region17: #{tpu_custom_call.1} parent=1 // pred_fallthru
      _
    // Predicated region
    $region18: #{tpu_custom_call.1} parent=1 // pred_check
      _
    $region19: #{tpu_custom_call.1} parent=1 // pred_check_branch
      %64 = sbr.rel (0) target = $region21
    $region20: #{tpu_custom_call.1} parent=1 // pred_region
      _
    $region21: #{tpu_custom_call.1} parent=1 // pred_fallthru
      _
    // Predicated region
    $region22: #{tpu_custom_call.1} parent=1 // pred_check
      _
    $region23: #{tpu_custom_call.1} parent=1 // pred_check_branch
      %66 = sbr.rel (0) target = $region25
    $region24: #{tpu_custom_call.1} parent=1 // pred_region
      %67 = dma.done [#allocation3], 128
    $region25: #{tpu_custom_call.1} parent=1 // pred_fallthru
      _
    // Predicated region
    $region26: #{tpu_custom_call.1} parent=1 // pred_check
      _
    $region27: #{tpu_custom_call.1} parent=1 // pred_check_branch
      %69 = sbr.rel (0) target = $region29
    $region28: #{tpu_custom_call.1} parent=1 // pred_region
      %70 = dma.done [#allocation6], 128
    $region29: #{tpu_custom_call.1} parent=1 // pred_fallthru
      _
    // Predicated region
    $region30: #{tpu_custom_call.1} parent=1 // pred_check
      _
    $region31: #{tpu_custom_call.1} parent=1 // pred_check_branch
      %72 = sbr.rel (0) target = $region33
    $region32: #{tpu_custom_call.1} parent=1 // pred_region
      %73 = dma.done [#allocation6], 512
    $region33: #{tpu_custom_call.1} parent=1 // pred_fallthru
      _
    // Predicated region
    $region34: #{tpu_custom_call.1} parent=1 // pred_check
      _
    $region35: #{tpu_custom_call.1} parent=1 // pred_check_branch
      %75 = sbr.rel (0) target = $region37
    $region36: #{tpu_custom_call.1} parent=1 // pred_region
      %76 = dma.done [#allocation9], 512
    $region37: #{tpu_custom_call.1} parent=1 // pred_fallthru
      _
    %v77 = vld [vmem:[#allocation2] sm:$0xff]
    %v78 = vld [vmem:[#allocation7] sm:$0xff]
    %v79 = vld [vmem:[#allocation7 + $0x8] sm:$0xff]
    %v80 = vld [vmem:[#allocation7 + $0x10] sm:$0xff]
    %v81 = vld [vmem:[#allocation7 + $0x18] sm:$0xff]
    %v82 = vld [vmem:[#allocation5] sm:$0xff]
    %v83 = vld [vmem:[#allocation8] sm:$0xff]
    %v84 = vld [vmem:[#allocation8 + $0x8] sm:$0xff]
    %v85 = vld [vmem:[#allocation8 + $0x10] sm:$0xff]
    %v86 = vld [vmem:[#allocation8 + $0x18] sm:$0xff]
    %vm87 = vcmask 261120
    %v89 = vsel %vm87, %v82, 0
    %91 = vmatprep.subr.mxu0 0.0
    %92 = vmatpush1.msra.mxu0 %v83
    %93 = vmatprep.subr.mxu0 0.0
    %94 = vmatpush1.msra.mxu0 %v84
    %95 = vmatprep.subr.mxu0 0.0
    %96 = vmatpush1.msra.mxu0 %v85
    %97 = vmatprep.subr.mxu0 0.0
    %98 = vmatpush1.msra.mxu0 %v86
    %99 = vmatprep.subr.mxu0 0.0
    %100 = vmatpush1.msra.mxu0 0.0
    %101 = vmatprep.subr.mxu0 0.0
    %102 = vmatpush1.msra.mxu0 0.0
    %103 = vmatprep.subr.mxu0 0.0
    %104 = vmatpush1.msra.mxu0 0.0
    %105 = vmatprep.subr.mxu0 0.0
    %106 = vmatpush1.msra.mxu0 0.0
    %107 = vmatprep.subr.mxu0 0.0
    %108 = vmatpush1.msra.mxu0 0.0
    %109 = vmatprep.subr.mxu0 0.0
    %110 = vmatpush1.msra.mxu0 0.0
    %111 = vmatprep.subr.mxu0 0.0
    %112 = vmatpush1.msra.mxu0 0.0
    %113 = vmatprep.subr.mxu0 0.0
    %114 = vmatpush1.msra.mxu0 0.0
    %115 = vmatprep.subr.mxu0 0.0
    %116 = vmatpush1.msra.mxu0 0.0
    %117 = vmatprep.subr.mxu0 0.0
    %118 = vmatpush1.msra.mxu0 0.0
    %119 = vmatprep.subr.mxu0 0.0
    %120 = vmatpush1.msra.mxu0 0.0
    %121 = vmatprep.subr.mxu0 0.0
    %122 = vmatpush1.msra.mxu0 0.0
    %123 = vmatprep.subr.mxu0 0.0
    %124 = vmatpush1.msra.mxu0 0.0
    %125 = vmatprep.subr.mxu0 0.0
    %126 = vmatpush1.msra.mxu0 0.0
    %127 = vmatprep.subr.mxu0 0.0
    %128 = vmatpush1.msra.mxu0 0.0
    %129 = vmatprep.subr.mxu0 0.0
    %130 = vmatpush1.msra.mxu0 0.0
    %131 = vmatprep.subr.mxu0 0.0
    %132 = vmatpush1.msra.mxu0 0.0
    %133 = vmatprep.subr.mxu0 0.0
    %134 = vmatpush1.msra.mxu0 0.0
    %135 = vmatprep.subr.mxu0 0.0
    %136 = vmatpush1.msra.mxu0 0.0
    %137 = vmatprep.subr.mxu0 0.0
    %138 = vmatpush1.msra.mxu0 0.0
    %139 = vmatprep.subr.mxu0 0.0
    %140 = vmatpush1.msra.mxu0 0.0
    %141 = vmatprep.subr.mxu0 0.0
    %142 = vmatpush1.msra.mxu0 0.0
    %143 = vmatprep.subr.mxu0 0.0
    %144 = vmatpush1.msra.mxu0 0.0
    %145 = vmatprep.subr.mxu0 0.0
    %146 = vmatpush1.msra.mxu0 0.0
    %147 = vmatprep.subr.mxu0 0.0
    %148 = vmatpush1.msra.mxu0 0.0
    %149 = vmatprep.subr.mxu0 0.0
    %150 = vmatpush1.msra.mxu0 0.0
    %151 = vmatprep.subr.mxu0 0.0
    %152 = vmatpush1.msra.mxu0 0.0
    %153 = vmatprep.subr.mxu0 0.0
    %154 = vmatpush1.msra.mxu0 0.0
    %155 = vmatprep.mubr.f32.mxu0 0.0
    %156 = vmatmul.mubr.f32.gmra.mrb[0].mxu0 %v89
    %v157 = vpop.f32.mrb[0].mxu0
    %v158 = vadd.f32 0.0, %v157
    %v159 = vpop.f32.mrb[0].mxu0
    %160 = vdwg.mxu0
    %v162 = vsel %vm87, %v77, 0
    %164 = vmatprep.subr.mxu0 0.0
    %165 = vmatpush1.msra.mxu0 %v78
    %166 = vmatprep.subr.mxu0 0.0
    %167 = vmatpush1.msra.mxu0 %v79
    %168 = vmatprep.subr.mxu0 0.0
    %169 = vmatpush1.msra.mxu0 %v80
    %170 = vmatprep.subr.mxu0 0.0
    %171 = vmatpush1.msra.mxu0 %v81
    %172 = vmatprep.subr.mxu0 0.0
    %173 = vmatpush1.msra.mxu0 0.0
    %174 = vmatprep.subr.mxu0 0.0
    %175 = vmatpush1.msra.mxu0 0.0
    %176 = vmatprep.subr.mxu0 0.0
    %177 = vmatpush1.msra.mxu0 0.0
    %178 = vmatprep.subr.mxu0 0.0
    %179 = vmatpush1.msra.mxu0 0.0
    %180 = vmatprep.subr.mxu0 0.0
    %181 = vmatpush1.msra.mxu0 0.0
    %182 = vmatprep.subr.mxu0 0.0
    %183 = vmatpush1.msra.mxu0 0.0
    %184 = vmatprep.subr.mxu0 0.0
    %185 = vmatpush1.msra.mxu0 0.0
    %186 = vmatprep.subr.mxu0 0.0
    %187 = vmatpush1.msra.mxu0 0.0
    %188 = vmatprep.subr.mxu0 0.0
    %189 = vmatpush1.msra.mxu0 0.0
    %190 = vmatprep.subr.mxu0 0.0
    %191 = vmatpush1.msra.mxu0 0.0
    %192 = vmatprep.subr.mxu0 0.0
    %193 = vmatpush1.msra.mxu0 0.0
    %194 = vmatprep.subr.mxu0 0.0
    %195 = vmatpush1.msra.mxu0 0.0
    %196 = vmatprep.subr.mxu0 0.0
    %197 = vmatpush1.msra.mxu0 0.0
    %198 = vmatprep.subr.mxu0 0.0
    %199 = vmatpush1.msra.mxu0 0.0
    %200 = vmatprep.subr.mxu0 0.0
    %201 = vmatpush1.msra.mxu0 0.0
    %202 = vmatprep.subr.mxu0 0.0
    %203 = vmatpush1.msra.mxu0 0.0
    %204 = vmatprep.subr.mxu0 0.0
    %205 = vmatpush1.msra.mxu0 0.0
    %206 = vmatprep.subr.mxu0 0.0
    %207 = vmatpush1.msra.mxu0 0.0
    %208 = vmatprep.subr.mxu0 0.0
    %209 = vmatpush1.msra.mxu0 0.0
    %210 = vmatprep.subr.mxu0 0.0
    %211 = vmatpush1.msra.mxu0 0.0
    %212 = vmatprep.subr.mxu0 0.0
    %213 = vmatpush1.msra.mxu0 0.0
    %214 = vmatprep.subr.mxu0 0.0
    %215 = vmatpush1.msra.mxu0 0.0
    %216 = vmatprep.subr.mxu0 0.0
    %217 = vmatpush1.msra.mxu0 0.0
    %218 = vmatprep.subr.mxu0 0.0
    %219 = vmatpush1.msra.mxu0 0.0
    %220 = vmatprep.subr.mxu0 0.0
    %221 = vmatpush1.msra.mxu0 0.0
    %222 = vmatprep.subr.mxu0 0.0
    %223 = vmatpush1.msra.mxu0 0.0
    %224 = vmatprep.subr.mxu0 0.0
    %225 = vmatpush1.msra.mxu0 0.0
    %226 = vmatprep.subr.mxu0 0.0
    %227 = vmatpush1.msra.mxu0 0.0
    %228 = vmatprep.mubr.f32.mxu0 0.0
    %229 = vmatmul.mubr.f32.gmra.mrb[0].mxu0 %v162
    %v230 = vpop.f32.mrb[0].mxu0
    %v231 = vadd.f32 %v158, %v230
    %v232 = vpop.f32.mrb[0].mxu0
    %233 = vdwg.mxu0
    %v234 = vld [vmem:[%s4] sm:$0x1]
    %v236 = vlaneseq
    %v237 = vshrl.u32 %v236, 7
    %v238 = vsub.s32 0, %v237
    %v239 = vrot.slane %v234, %v238
    %v241 = vadd.f32 %v231, %v239
    %242 = vst.msk [vmem:[#allocation10] sm:$0xff] %vm87, %v241
    %244 = vrot.lane.b32.xlu0 %v241, 96
    %v245 = vpop.permute.xlu0 %244
    %vm247 = vcmask 64512
    %248 = vst.msk [vmem:[#allocation11] sm:$0xff] %vm247, %v245
    %249 = vrot.lane.b32.xlu0 %v241, 88
    %v250 = vpop.permute.xlu0 %249
    %252 = vst.msk [vmem:[#allocation13] sm:$0xff] %vm87, %v250
    %253 = vrot.lane.b32.xlu0 %v241, 56
    %v254 = vpop.permute.xlu0 %253
    %vm256 = vcmask 31744
    %257 = vst.msk [vmem:[%s8] sm:$0xff] %vm256, %v254
    // Predicated region
    $region38: #{tpu_custom_call.1} parent=1 // pred_check
      _
    $region39: #{tpu_custom_call.1} parent=1 // pred_check_branch
      %259 = sbr.rel (0) target = $region41
    $region40: #{tpu_custom_call.1} parent=1 // pred_region
      %s261 = ssub.s32 128, 128
      %262 = vsyncadd [#allocation4], %s261
      %s264 = sshll.u32 [#allocation10], 4
      %s265 = int_to_ptr.vmem [resolvable:$true] %s264
      %267 = dma.vmem_to_hbm [thread:$0]  %s265, 128, %s5, [#allocation4]
    $region41: #{tpu_custom_call.1} parent=1 // pred_fallthru
      _
    // Predicated region
    $region42: #{tpu_custom_call.1} parent=1 // pred_check
      _
    $region43: #{tpu_custom_call.1} parent=1 // pred_check_branch
      %269 = sbr.rel (0) target = $region45
    $region44: #{tpu_custom_call.1} parent=1 // pred_region
      %s271 = ssub.s32 128, 128
      %272 = vsyncadd [#allocation12], %s271
      %s274 = sshll.u32 [#allocation11], 4
      %s275 = int_to_ptr.vmem [resolvable:$true] %s274
      %277 = dma.vmem_to_hbm [thread:$0]  %s275, 128, %s6, [#allocation12]
    $region45: #{tpu_custom_call.1} parent=1 // pred_fallthru
      _
    // Predicated region
    $region46: #{tpu_custom_call.1} parent=1 // pred_check
      _
    $region47: #{tpu_custom_call.1} parent=1 // pred_check_branch
      %279 = sbr.rel (0) target = $region49
    $region48: #{tpu_custom_call.1} parent=1 // pred_region
      %s281 = ssub.s32 128, 128
      %282 = vsyncadd [#allocation12], %s281
      %s284 = sshll.u32 [#allocation13], 4
      %s285 = int_to_ptr.vmem [resolvable:$true] %s284
      %287 = dma.vmem_to_hbm [thread:$0]  %s285, 128, %s7, [#allocation12]
    $region49: #{tpu_custom_call.1} parent=1 // pred_fallthru
      _
    // Predicated region
    $region50: #{tpu_custom_call.1} parent=1 // pred_check
      _
    $region51: #{tpu_custom_call.1} parent=1 // pred_check_branch
      %289 = sbr.rel (0) target = $region53
    $region52: #{tpu_custom_call.1} parent=1 // pred_region
      _
    $region53: #{tpu_custom_call.1} parent=1 // pred_fallthru
      _
    // Predicated region
    $region54: #{tpu_custom_call.1} parent=1 // pred_check
      _
    $region55: #{tpu_custom_call.1} parent=1 // pred_check_branch
      %291 = sbr.rel (0) target = $region57
    $region56: #{tpu_custom_call.1} parent=1 // pred_region
      %292 = dma.done [#allocation4], 128
    $region57: #{tpu_custom_call.1} parent=1 // pred_fallthru
      _
    // Predicated region
    $region58: #{tpu_custom_call.1} parent=1 // pred_check
      _
    $region59: #{tpu_custom_call.1} parent=1 // pred_check_branch
      %294 = sbr.rel (0) target = $region61
    $region60: #{tpu_custom_call.1} parent=1 // pred_region
      %295 = dma.done [#allocation12], 128
    $region61: #{tpu_custom_call.1} parent=1 // pred_fallthru
      _
    // Predicated region
    $region62: #{tpu_custom_call.1} parent=1 // pred_check
      _
    $region63: #{tpu_custom_call.1} parent=1 // pred_check_branch
      %297 = sbr.rel (0) target = $region65
    $region64: #{tpu_custom_call.1} parent=1 // pred_region
      %298 = dma.done [#allocation12], 128
    $region65: #{tpu_custom_call.1} parent=1 // pred_fallthru
      _
    // Predicated region
    $region66: #{tpu_custom_call.1} parent=1 // pred_check
      _
    $region67: #{tpu_custom_call.1} parent=1 // pred_check_branch
      %300 = sbr.rel (0) target = $region69
    $region68: #{tpu_custom_call.1} parent=1 // pred_region
      _
    $region69: #{tpu_custom_call.1} parent=1 // pred_fallthru
      _
    %301 = vsyncpa [#allocation3], 1
    %302 = vsyncpa [#allocation6], 1
    %303 = vsyncpa [#allocation9], 1
    %304 = vsyncpa [#allocation4], 1
    %305 = vsyncpa [#allocation12], 1

</llo_original>
